<compile_context>
chip_gen: v7x
topology: tpu7x:2x2x1
jax: 0.10.0
libtpu: 0.0.40
codegen_flags: <defaults>
</compile_context>

<pallas_src>
import functools

import jax
import jax.numpy as jnp
from jax.experimental import pallas as pl
from jax.experimental.pallas import tpu as pltpu


# ----------------------------------------------------------------------------
# Fused Pallas kernel: whole Attention_stage4 forward for a block of samples.
# ----------------------------------------------------------------------------
def _attention_stage4_kernel(*refs, H, W, ksize, pad, cout, bn, fuse_trunk):
    HW = H * W
    if fuse_trunk:
        (mask3_ref, x_ref, wm_ref, bm_ref, w2_ref, b2_ref,
         o_ref, xtap_ref, ytap_ref) = refs
    else:
        (mask3_ref, maskt_ref, x_ref, wm_ref, bm_ref, wt_ref, bt_ref,
         w2_ref, b2_ref, o_ref, xtap_ref, ytap_ref, ttap_ref) = refs

    # Resident operands, loaded once per grid step.
    m3 = mask3_ref[...]                      # (9, HW) border masks, 3x3 stencil
    wm = wm_ref[...]                         # ({3|2}*Cout, 9*Cin) stacked weights
    bm = bm_ref[...]                         # ({3|2}*Cout, 1)
    w2 = w2_ref[...]                         # (Cout, 9*Cout)
    b2 = b2_ref[...]                         # (Cout, 1)
    if not fuse_trunk:
        mt = maskt_ref[...]
        wt = wt_ref[...]
        bt = bt_ref[...]

    def gather_taps(src, tap_ref, masks, k, p):
        """Stream k*k shifted+masked copies of src (C, HW) into tap_ref (k*k*C, HW)."""
        c = src.shape[0]
        for kh in range(k):
            for kw in range(k):
                t = kh * k + kw
                dh, dw = kh - p, kw - p
                d = dh * W + dw
                # output[:, p] = src[:, p + d]; wrap-around is zeroed by the mask.
                v = src if d == 0 else pltpu.roll(src, shift=(-d) % HW, axis=1)
                if dh != 0 or dw != 0:
                    v = v * masks[t:t + 1, :]          # implicit zero padding
                tap_ref[t * c:(t + 1) * c, :] = v

    for b in range(bn):                      # static, unrolled loop over the batch block
        x = x_ref[b].astype(jnp.float32)     # (Cin, HW), lanes = H*W

        # --- trunk conv + residual conv1 + 1x1 shortcut: ONE matmul over shared taps
        gather_taps(x, xtap_ref, m3, 3, 1)
        main = jnp.dot(wm, xtap_ref[...],
                       preferred_element_type=jnp.float32) + bm
        if fuse_trunk:
            trunk = jnp.maximum(main[:cout], 0.0)          # MCNN_layer (conv + ReLU)
            y1 = jnp.maximum(main[cout:2 * cout], 0.0)     # Res conv1 + ReLU
            sc = main[2 * cout:]                           # 1x1 shortcut
        else:
            y1 = jnp.maximum(main[:cout], 0.0)
            sc = main[cout:]
            gather_taps(x, ttap_ref, mt, ksize, pad)       # separate trunk stencil
            trunk = jnp.maximum(
                jnp.dot(wt, ttap_ref[...],
                        preferred_element_type=jnp.float32) + bt, 0.0)

        # --- residual conv2: one matmul over y1 taps ---
        gather_taps(y1, ytap_ref, m3, 3, 1)
        y2 = jnp.dot(w2, ytap_ref[...], preferred_element_type=jnp.float32) + b2

        res = y2 + sc
        o_ref[b] = ((1.0 + jax.nn.sigmoid(res)) * trunk).astype(o_ref.dtype)


# ----------------------------------------------------------------------------
# Host-side helpers
# ----------------------------------------------------------------------------
def _border_masks(H, W, k, pad):
    """(k*k, H*W) f32 masks: mask[t, h*W+w] = 1 iff tap (kh,kw)=divmod(t,k) is in-image."""
    pos = jnp.arange(H * W, dtype=jnp.int32)
    row, col = pos // W, pos % W
    rows = []
    for kh in range(k):
        for kw in range(k):
            dh, dw = kh - pad, kw - pad
            valid = ((row + dh >= 0) & (row + dh < H) &
                     (col + dw >= 0) & (col + dw < W))
            rows.append(valid.astype(jnp.float32))
    return jnp.stack(rows, axis=0)


def _default_batch_block(n):
    """Largest divisor of n that keeps >= 2 grid steps: both v7x TensorCores stay
    fed, while per-step overhead is amortized on single-TC v5e/v6e."""
    for bn in range(max(n // 2, 1), 0, -1):
        if n % bn == 0:
            return bn
    return 1


# ----------------------------------------------------------------------------
# Wrapper
# ----------------------------------------------------------------------------
def attention_stage4_forward(packed, x_nchw, *, ksize, padding, stride,
                             batch_block=None):
    n, cin, hgt, wid = x_nchw.shape
    if stride != 1 or 2 * padding != ksize - 1:
        # TODO(synk): strided / non-'same' MCNN_layer variants need a different
        #             output tiling and are not implemented here.
        raise ValueError("fused kernel assumes stride=1 and a 'same' trunk conv so "
                         "trunk/residual spatial shapes match")
    hw = hgt * wid
    fuse = (ksize == 3 and padding == 1)
    cout = packed["w2"].shape[0]
    bn = _default_batch_block(n) if batch_block is None else batch_block
    if n % bn != 0:
        raise ValueError("batch_block must divide the batch size")

    x_flat = x_nchw.reshape(n, cin, hw)            # NCHW stays contiguous: free reshape
    mask3 = _border_masks(hgt, wid, 3, 1)          # constant-folded under jit

    kernel = functools.partial(_attention_stage4_kernel, H=hgt, W=wid, ksize=ksize,
                               pad=padding, cout=cout, bn=bn, fuse_trunk=fuse)

    def resident(arr):                             # whole array, same block every step
        return pl.BlockSpec(arr.shape, lambda i: (0,) * arr.ndim)

    inputs, in_specs = [mask3], [resident(mask3)]
    if not fuse:
        maskt = _border_masks(hgt, wid, ksize, padding)
        inputs.append(maskt)
        in_specs.append(resident(maskt))
    inputs.append(x_flat)
    in_specs.append(pl.BlockSpec((bn, cin, hw), lambda i: (i, 0, 0)))
    weight_names = (["w_main", "b_main"]
                    + ([] if fuse else ["w_trunk", "b_trunk"])
                    + ["w2", "b2"])
    for name in weight_names:
        inputs.append(packed[name])
        in_specs.append(resident(packed[name]))

    scratch = [pltpu.VMEM((9 * cin, hw), jnp.float32),    # x taps (matmul operand)
               pltpu.VMEM((9 * cout, hw), jnp.float32)]   # y1 taps
    if not fuse:
        scratch.append(pltpu.VMEM((ksize * ksize * cin, hw), jnp.float32))

    # Per-step VMEM footprint here is < 0.5 MiB, far below v7x's 64 MiB; for much
    # larger H*W the spatial axis would need halo tiling.
    # TODO(synk): spatial halo tiling for large stage-4 feature maps.
    out = pl.pallas_call(
        kernel,
        out_shape=jax.ShapeDtypeStruct((n, cout, hw), x_nchw.dtype),
        grid_spec=pltpu.PrefetchScalarGridSpec(
            num_scalar_prefetch=0,
            grid=(n // bn,),                     # bn samples per grid step
            in_specs=in_specs,
            out_specs=pl.BlockSpec((bn, cout, hw), lambda i: (i, 0, 0)),
            scratch_shapes=scratch,
        ),
        compiler_params=pltpu.CompilerParams(dimension_semantics=("parallel",)),
    )(*inputs)
    return out.reshape(n, cout, hgt, wid)          # free reshape, already NCHW


# ----------------------------------------------------------------------------
# Parameters
# ----------------------------------------------------------------------------
def init_params(key, in_channels, out_channels, ksize):
    """PyTorch-layout (OIHW) parameters; deterministic init."""
    ks = jax.random.split(key, 8)
    sc = 0.1

    def conv_w(k, co, ci, ksz):
        return sc * jax.random.normal(k, (co, ci, ksz, ksz), jnp.float32)

    def conv_b(k, co):
        return sc * jax.random.normal(k, (co,), jnp.float32)

    return {
        "trunk_w": conv_w(ks[0], out_channels, in_channels, ksize),
        "trunk_b": conv_b(ks[1], out_channels),
        "res_w1": conv_w(ks[2], out_channels, in_channels, 3),
        "res_b1": conv_b(ks[3], out_channels),
        "res_w2": conv_w(ks[4], out_channels, out_channels, 3),
        "res_b2": conv_b(ks[5], out_channels),
        "res_ws": conv_w(ks[6], out_channels, in_channels, 1),
        "res_bs": conv_b(ks[7], out_channels),
    }


def pack_params(p, *, ksize, padding):
    """Hoisted weight repack.

    Each OIHW conv weight becomes a (Cout, k*k*Cin) matrix (tap-major, Cin-minor)
    so a k x k conv is ONE matmul against the concatenated shifted-tap tensor.
    When the trunk is a 3x3/'same' conv, trunk + res-conv1 + 1x1-shortcut are
    stacked into a single (3*Cout, 9*Cin) matrix; the shortcut occupies the
    centre tap (column block index pad*k + pad = 4 of the 3x3 stencil).
    """
    cout, cin = p["res_ws"].shape[0], p["res_ws"].shape[1]

    def pconv(w):                                   # OIHW -> (O, Kh*Kw*I)
        o, i, kh, kw = w.shape
        return jnp.transpose(w, (0, 2, 3, 1)).reshape(o, kh * kw * i)

    w_res1 = pconv(p["res_w1"])                     # (Cout, 9*Cin)
    w_sc = jnp.zeros((cout, 9 * cin), jnp.float32)
    w_sc = w_sc.at[:, 4 * cin:5 * cin].set(p["res_ws"][:, :, 0, 0])

    packed = {"w2": pconv(p["res_w2"]), "b2": p["res_b2"].reshape(-1, 1)}
    if ksize == 3 and padding == 1:
        packed["w_main"] = jnp.concatenate([pconv(p["trunk_w"]), w_res1, w_sc], axis=0)
        packed["b_main"] = jnp.concatenate(
            [p["trunk_b"], p["res_b1"], p["res_bs"]]).reshape(-1, 1)
    else:
        packed["w_main"] = jnp.concatenate([w_res1, w_sc], axis=0)
        packed["b_main"] = jnp.concatenate([p["res_b1"], p["res_bs"]]).reshape(-1, 1)
        packed["w_trunk"] = pconv(p["trunk_w"])
        packed["b_trunk"] = p["trunk_b"].reshape(-1, 1)
    return packed


# ----------------------------------------------------------------------------
# Pure-JAX reference (correctness check)
# ----------------------------------------------------------------------------
def reference_forward(p, x, *, ksize, padding, stride):
    def conv(inp, w, b, strd, pad, relu):
        out = jax.lax.conv_general_dilated(
            inp, w, window_strides=(strd, strd),
            padding=[(pad, pad), (pad, pad)],
            dimension_numbers=("NCHW", "OIHW", "NCHW"),
            precision=jax.lax.Precision.HIGHEST)
        out = out + b.reshape(1, -1, 1, 1)
        return jnp.maximum(out, 0.0) if relu else out

    trunk = conv(x, p["trunk_w"], p["trunk_b"], stride, padding, True)
    y1 = conv(x, p["res_w1"], p["res_b1"], 1, 1, True)
    y2 = conv(y1, p["res_w2"], p["res_b2"], 1, 1, False)
    sc = conv(x, p["res_ws"], p["res_bs"], 1, 0, False)
    return (1.0 + jax.nn.sigmoid(y2 + sc)) * trunk


if __name__ == "__main__":
    batch, in_channels, out_channels = 2, 4, 8
    h = w = 16
    ksize, padding, stride = 3, 1, 1

    key = jax.random.PRNGKey(0)
    kx, kp = jax.random.split(key)
    x = jax.random.normal(kx, (batch, in_channels, h, w), jnp.float32)
    params_oihw = init_params(kp, in_channels, out_channels, ksize)
    params = pack_params(params_oihw, ksize=ksize, padding=padding)

    fwd = jax.jit(functools.partial(attention_stage4_forward,
                                    ksize=ksize, padding=padding, stride=stride))
    out = fwd(params, x)
    jax.block_until_ready(out)
    assert out.shape == (batch, out_channels, h, w)

    ref = reference_forward(params_oihw, x, ksize=ksize, padding=padding, stride=stride)
    err = float(jnp.max(jnp.abs(out - ref)))
    # Tightened from 5e-2: the consolidated f32 MXU matmuls should match the
    # HIGHEST-precision XLA convs to well under this bound.
    assert err < 2e-3, f"max abs error vs reference: {err}"
    print("KERNEL_OK")
</pallas_src>

<mosaic_0001>
module attributes {stable_mosaic.version = 11 : i64} {
  func.func @_attention_stage4_kernel(%arg0: i32, %arg1: memref<9x256xf32, #tpu.memory_space<vmem>>, %arg2: memref<1x4x256xf32, #tpu.memory_space<vmem>>, %arg3: memref<24x36xf32, #tpu.memory_space<vmem>>, %arg4: memref<24x1xf32, #tpu.memory_space<vmem>>, %arg5: memref<8x72xf32, #tpu.memory_space<vmem>>, %arg6: memref<8x1xf32, #tpu.memory_space<vmem>>, %arg7: memref<1x8x256xf32, #tpu.memory_space<vmem>>, %arg8: memref<36x256xf32, #tpu.memory_space<vmem>>, %arg9: memref<72x256xf32, #tpu.memory_space<vmem>>) attributes {dimension_semantics = [#tpu.dimension_semantics<parallel>], iteration_bounds = array<i64: 2>, scalar_prefetch = 0 : i64, scratch_operands = 2 : i64, tpu.core_type = #tpu.core_type<tc>, window_params = [{pipeline_mode = #tpu.pipeline_mode<synchronous>, transform_indices = @transform_0, window_bounds = array<i64: 9, 256>}, {transform_indices = @transform_1, window_bounds = array<i64: 1, 4, 256>}, {pipeline_mode = #tpu.pipeline_mode<synchronous>, transform_indices = @transform_2, window_bounds = array<i64: 24, 36>}, {pipeline_mode = #tpu.pipeline_mode<synchronous>, transform_indices = @transform_3, window_bounds = array<i64: 24, 1>}, {pipeline_mode = #tpu.pipeline_mode<synchronous>, transform_indices = @transform_4, window_bounds = array<i64: 8, 72>}, {pipeline_mode = #tpu.pipeline_mode<synchronous>, transform_indices = @transform_5, window_bounds = array<i64: 8, 1>}, {transform_indices = @transform_6, window_bounds = array<i64: 1, 8, 256>}]} {
    %c0 = arith.constant 0 : index
    %c0_0 = arith.constant 0 : index
    %0 = vector.load %arg1[%c0, %c0_0] : memref<9x256xf32, #tpu.memory_space<vmem>>, vector<9x256xf32>
    %c0_1 = arith.constant 0 : index
    %c0_2 = arith.constant 0 : index
    %1 = vector.load %arg3[%c0_1, %c0_2] : memref<24x36xf32, #tpu.memory_space<vmem>>, vector<24x36xf32>
    %c0_3 = arith.constant 0 : index
    %c0_4 = arith.constant 0 : index
    %2 = vector.load %arg4[%c0_3, %c0_4] : memref<24x1xf32, #tpu.memory_space<vmem>>, vector<24x1xf32>
    %c0_5 = arith.constant 0 : index
    %c0_6 = arith.constant 0 : index
    %3 = vector.load %arg5[%c0_5, %c0_6] : memref<8x72xf32, #tpu.memory_space<vmem>>, vector<8x72xf32>
    %c0_7 = arith.constant 0 : index
    %c0_8 = arith.constant 0 : index
    %4 = vector.load %arg6[%c0_7, %c0_8] : memref<8x1xf32, #tpu.memory_space<vmem>>, vector<8x1xf32>
    %c0_9 = arith.constant 0 : index
    %c0_10 = arith.constant 0 : index
    %c0_11 = arith.constant 0 : index
    %5 = vector.load %arg2[%c0_9, %c0_10, %c0_11] : memref<1x4x256xf32, #tpu.memory_space<vmem>>, vector<1x4x256xf32>
    %6 = vector.shape_cast %5 : vector<1x4x256xf32> to vector<4x256xf32>
    %c17_i32 = arith.constant 17 : i32
    %7 = tpu.dynamic_rotate %6 by %c17_i32 dim 1 : vector<4x256xf32>, i32 -> vector<4x256xf32>
    %8 = vector.extract_strided_slice %0 {offsets = [0, 0], sizes = [1, 256], strides = [1, 1]} : vector<9x256xf32> to vector<1x256xf32>
    %9 = vector.broadcast %8 : vector<1x256xf32> to vector<4x256xf32>
    %10 = arith.mulf %7, %9 : vector<4x256xf32>
    %c0_12 = arith.constant 0 : index
    %c0_13 = arith.constant 0 : index
    %11 = vector.load %arg8[%c0_12, %c0_13] : memref<36x256xf32, #tpu.memory_space<vmem>>, vector<4x256xf32>
    tpu.vector_store %arg8[%c0_12, %c0_13], %10 {strides = array<i32>} : memref<36x256xf32, #tpu.memory_space<vmem>>, vector<4x256xf32>,
    %c16_i32 = arith.constant 16 : i32
    %12 = tpu.dynamic_rotate %6 by %c16_i32 dim 1 : vector<4x256xf32>, i32 -> vector<4x256xf32>
    %13 = vector.extract_strided_slice %0 {offsets = [1, 0], sizes = [1, 256], strides = [1, 1]} : vector<9x256xf32> to vector<1x256xf32>
    %14 = vector.broadcast %13 : vector<1x256xf32> to vector<4x256xf32>
    %15 = arith.mulf %12, %14 : vector<4x256xf32>
    %c4 = arith.constant 4 : index
    %c0_14 = arith.constant 0 : index
    %16 = vector.load %arg8[%c4, %c0_14] : memref<36x256xf32, #tpu.memory_space<vmem>>, vector<4x256xf32>
    tpu.vector_store %arg8[%c4, %c0_14], %15 {strides = array<i32>} : memref<36x256xf32, #tpu.memory_space<vmem>>, vector<4x256xf32>,
    %c15_i32 = arith.constant 15 : i32
    %17 = tpu.dynamic_rotate %6 by %c15_i32 dim 1 : vector<4x256xf32>, i32 -> vector<4x256xf32>
    %18 = vector.extract_strided_slice %0 {offsets = [2, 0], sizes = [1, 256], strides = [1, 1]} : vector<9x256xf32> to vector<1x256xf32>
    %19 = vector.broadcast %18 : vector<1x256xf32> to vector<4x256xf32>
    %20 = arith.mulf %17, %19 : vector<4x256xf32>
    %c8 = arith.constant 8 : index
    %c0_15 = arith.constant 0 : index
    %21 = vector.load %arg8[%c8, %c0_15] : memref<36x256xf32, #tpu.memory_space<vmem>>, vector<4x256xf32>
    tpu.vector_store %arg8[%c8, %c0_15], %20 {strides = array<i32>} : memref<36x256xf32, #tpu.memory_space<vmem>>, vector<4x256xf32>,
    %c1_i32 = arith.constant 1 : i32
    %22 = tpu.dynamic_rotate %6 by %c1_i32 dim 1 : vector<4x256xf32>, i32 -> vector<4x256xf32>
    %23 = vector.extract_strided_slice %0 {offsets = [3, 0], sizes = [1, 256], strides = [1, 1]} : vector<9x256xf32> to vector<1x256xf32>
    %24 = vector.broadcast %23 : vector<1x256xf32> to vector<4x256xf32>
    %25 = arith.mulf %22, %24 : vector<4x256xf32>
    %c12 = arith.constant 12 : index
    %c0_16 = arith.constant 0 : index
    %26 = vector.load %arg8[%c12, %c0_16] : memref<36x256xf32, #tpu.memory_space<vmem>>, vector<4x256xf32>
    tpu.vector_store %arg8[%c12, %c0_16], %25 {strides = array<i32>} : memref<36x256xf32, #tpu.memory_space<vmem>>, vector<4x256xf32>,
    %c16 = arith.constant 16 : index
    %c0_17 = arith.constant 0 : index
    %27 = vector.load %arg8[%c16, %c0_17] : memref<36x256xf32, #tpu.memory_space<vmem>>, vector<4x256xf32>
    tpu.vector_store %arg8[%c16, %c0_17], %6 {strides = array<i32>} : memref<36x256xf32, #tpu.memory_space<vmem>>, vector<4x256xf32>,
    %c255_i32 = arith.constant 255 : i32
    %28 = tpu.dynamic_rotate %6 by %c255_i32 dim 1 : vector<4x256xf32>, i32 -> vector<4x256xf32>
    %29 = vector.extract_strided_slice %0 {offsets = [5, 0], sizes = [1, 256], strides = [1, 1]} : vector<9x256xf32> to vector<1x256xf32>
    %30 = vector.broadcast %29 : vector<1x256xf32> to vector<4x256xf32>
    %31 = arith.mulf %28, %30 : vector<4x256xf32>
    %c20 = arith.constant 20 : index
    %c0_18 = arith.constant 0 : index
    %32 = vector.load %arg8[%c20, %c0_18] : memref<36x256xf32, #tpu.memory_space<vmem>>, vector<4x256xf32>
    tpu.vector_store %arg8[%c20, %c0_18], %31 {strides = array<i32>} : memref<36x256xf32, #tpu.memory_space<vmem>>, vector<4x256xf32>,
    %c241_i32 = arith.constant 241 : i32
    %33 = tpu.dynamic_rotate %6 by %c241_i32 dim 1 : vector<4x256xf32>, i32 -> vector<4x256xf32>
    %34 = vector.extract_strided_slice %0 {offsets = [6, 0], sizes = [1, 256], strides = [1, 1]} : vector<9x256xf32> to vector<1x256xf32>
    %35 = vector.broadcast %34 : vector<1x256xf32> to vector<4x256xf32>
    %36 = arith.mulf %33, %35 : vector<4x256xf32>
    %c24 = arith.constant 24 : index
    %c0_19 = arith.constant 0 : index
    %37 = vector.load %arg8[%c24, %c0_19] : memref<36x256xf32, #tpu.memory_space<vmem>>, vector<4x256xf32>
    tpu.vector_store %arg8[%c24, %c0_19], %36 {strides = array<i32>} : memref<36x256xf32, #tpu.memory_space<vmem>>, vector<4x256xf32>,
    %c240_i32 = arith.constant 240 : i32
    %38 = tpu.dynamic_rotate %6 by %c240_i32 dim 1 : vector<4x256xf32>, i32 -> vector<4x256xf32>
    %39 = vector.extract_strided_slice %0 {offsets = [7, 0], sizes = [1, 256], strides = [1, 1]} : vector<9x256xf32> to vector<1x256xf32>
    %40 = vector.broadcast %39 : vector<1x256xf32> to vector<4x256xf32>
    %41 = arith.mulf %38, %40 : vector<4x256xf32>
    %c28 = arith.constant 28 : index
    %c0_20 = arith.constant 0 : index
    %42 = vector.load %arg8[%c28, %c0_20] : memref<36x256xf32, #tpu.memory_space<vmem>>, vector<4x256xf32>
    tpu.vector_store %arg8[%c28, %c0_20], %41 {strides = array<i32>} : memref<36x256xf32, #tpu.memory_space<vmem>>, vector<4x256xf32>,
    %c239_i32 = arith.constant 239 : i32
    %43 = tpu.dynamic_rotate %6 by %c239_i32 dim 1 : vector<4x256xf32>, i32 -> vector<4x256xf32>
    %44 = vector.extract_strided_slice %0 {offsets = [8, 0], sizes = [1, 256], strides = [1, 1]} : vector<9x256xf32> to vector<1x256xf32>
    %45 = vector.broadcast %44 : vector<1x256xf32> to vector<4x256xf32>
    %46 = arith.mulf %43, %45 : vector<4x256xf32>
    %c32 = arith.constant 32 : index
    %c0_21 = arith.constant 0 : index
    %47 = vector.load %arg8[%c32, %c0_21] : memref<36x256xf32, #tpu.memory_space<vmem>>, vector<4x256xf32>
    tpu.vector_store %arg8[%c32, %c0_21], %46 {strides = array<i32>} : memref<36x256xf32, #tpu.memory_space<vmem>>, vector<4x256xf32>,
    %c0_22 = arith.constant 0 : index
    %c0_23 = arith.constant 0 : index
    %48 = vector.load %arg8[%c0_22, %c0_23] : memref<36x256xf32, #tpu.memory_space<vmem>>, vector<36x256xf32>
    %cst = arith.constant dense<0.000000e+00> : vector<24x256xf32>
    %49 = tpu.matmul %1, %48, %cst {dimension_numbers = #tpu.dot_dimension_numbers<[1], [0], [0], [1], [0, 0, 1, 1], [], []>} : vector<24x36xf32>, vector<36x256xf32>, vector<24x256xf32> -> vector<24x256xf32>
    %50 = vector.broadcast %2 : vector<24x1xf32> to vector<24x256xf32>
    %51 = arith.addf %49, %50 : vector<24x256xf32>
    %52 = vector.extract_strided_slice %51 {offsets = [0, 0], sizes = [8, 256], strides = [1, 1]} : vector<24x256xf32> to vector<8x256xf32>
    %cst_24 = arith.constant 0.000000e+00 : f32
    %53 = vector.broadcast %cst_24 : f32 to vector<8x256xf32>
    %54 = arith.maximumf %52, %53 : vector<8x256xf32>
    %55 = vector.extract_strided_slice %51 {offsets = [8, 0], sizes = [8, 256], strides = [1, 1]} : vector<24x256xf32> to vector<8x256xf32>
    %cst_25 = arith.constant 0.000000e+00 : f32
    %56 = vector.broadcast %cst_25 : f32 to vector<8x256xf32>
    %57 = arith.maximumf %55, %56 : vector<8x256xf32>
    %58 = vector.extract_strided_slice %51 {offsets = [16, 0], sizes = [8, 256], strides = [1, 1]} : vector<24x256xf32> to vector<8x256xf32>
    %c17_i32_26 = arith.constant 17 : i32
    %59 = tpu.dynamic_rotate %57 by %c17_i32_26 dim 1 : vector<8x256xf32>, i32 -> vector<8x256xf32>
    %60 = vector.extract_strided_slice %0 {offsets = [0, 0], sizes = [1, 256], strides = [1, 1]} : vector<9x256xf32> to vector<1x256xf32>
    %61 = vector.broadcast %60 : vector<1x256xf32> to vector<8x256xf32>
    %62 = arith.mulf %59, %61 : vector<8x256xf32>
    %c0_27 = arith.constant 0 : index
    %c0_28 = arith.constant 0 : index
    %63 = vector.load %arg9[%c0_27, %c0_28] : memref<72x256xf32, #tpu.memory_space<vmem>>, vector<8x256xf32>
    tpu.vector_store %arg9[%c0_27, %c0_28], %62 {strides = array<i32>} : memref<72x256xf32, #tpu.memory_space<vmem>>, vector<8x256xf32>,
    %c16_i32_29 = arith.constant 16 : i32
    %64 = tpu.dynamic_rotate %57 by %c16_i32_29 dim 1 : vector<8x256xf32>, i32 -> vector<8x256xf32>
    %65 = vector.extract_strided_slice %0 {offsets = [1, 0], sizes = [1, 256], strides = [1, 1]} : vector<9x256xf32> to vector<1x256xf32>
    %66 = vector.broadcast %65 : vector<1x256xf32> to vector<8x256xf32>
    %67 = arith.mulf %64, %66 : vector<8x256xf32>
    %c8_30 = arith.constant 8 : index
    %c0_31 = arith.constant 0 : index
    %68 = vector.load %arg9[%c8_30, %c0_31] : memref<72x256xf32, #tpu.memory_space<vmem>>, vector<8x256xf32>
    tpu.vector_store %arg9[%c8_30, %c0_31], %67 {strides = array<i32>} : memref<72x256xf32, #tpu.memory_space<vmem>>, vector<8x256xf32>,
    %c15_i32_32 = arith.constant 15 : i32
    %69 = tpu.dynamic_rotate %57 by %c15_i32_32 dim 1 : vector<8x256xf32>, i32 -> vector<8x256xf32>
    %70 = vector.extract_strided_slice %0 {offsets = [2, 0], sizes = [1, 256], strides = [1, 1]} : vector<9x256xf32> to vector<1x256xf32>
    %71 = vector.broadcast %70 : vector<1x256xf32> to vector<8x256xf32>
    %72 = arith.mulf %69, %71 : vector<8x256xf32>
    %c16_33 = arith.constant 16 : index
    %c0_34 = arith.constant 0 : index
    %73 = vector.load %arg9[%c16_33, %c0_34] : memref<72x256xf32, #tpu.memory_space<vmem>>, vector<8x256xf32>
    tpu.vector_store %arg9[%c16_33, %c0_34], %72 {strides = array<i32>} : memref<72x256xf32, #tpu.memory_space<vmem>>, vector<8x256xf32>,
    %c1_i32_35 = arith.constant 1 : i32
    %74 = tpu.dynamic_rotate %57 by %c1_i32_35 dim 1 : vector<8x256xf32>, i32 -> vector<8x256xf32>
    %75 = vector.extract_strided_slice %0 {offsets = [3, 0], sizes = [1, 256], strides = [1, 1]} : vector<9x256xf32> to vector<1x256xf32>
    %76 = vector.broadcast %75 : vector<1x256xf32> to vector<8x256xf32>
    %77 = arith.mulf %74, %76 : vector<8x256xf32>
    %c24_36 = arith.constant 24 : index
    %c0_37 = arith.constant 0 : index
    %78 = vector.load %arg9[%c24_36, %c0_37] : memref<72x256xf32, #tpu.memory_space<vmem>>, vector<8x256xf32>
    tpu.vector_store %arg9[%c24_36, %c0_37], %77 {strides = array<i32>} : memref<72x256xf32, #tpu.memory_space<vmem>>, vector<8x256xf32>,
    %c32_38 = arith.constant 32 : index
    %c0_39 = arith.constant 0 : index
    %79 = vector.load %arg9[%c32_38, %c0_39] : memref<72x256xf32, #tpu.memory_space<vmem>>, vector<8x256xf32>
    tpu.vector_store %arg9[%c32_38, %c0_39], %57 {strides = array<i32>} : memref<72x256xf32, #tpu.memory_space<vmem>>, vector<8x256xf32>,
    %c255_i32_40 = arith.constant 255 : i32
    %80 = tpu.dynamic_rotate %57 by %c255_i32_40 dim 1 : vector<8x256xf32>, i32 -> vector<8x256xf32>
    %81 = vector.extract_strided_slice %0 {offsets = [5, 0], sizes = [1, 256], strides = [1, 1]} : vector<9x256xf32> to vector<1x256xf32>
    %82 = vector.broadcast %81 : vector<1x256xf32> to vector<8x256xf32>
    %83 = arith.mulf %80, %82 : vector<8x256xf32>
    %c40 = arith.constant 40 : index
    %c0_41 = arith.constant 0 : index
    %84 = vector.load %arg9[%c40, %c0_41] : memref<72x256xf32, #tpu.memory_space<vmem>>, vector<8x256xf32>
    tpu.vector_store %arg9[%c40, %c0_41], %83 {strides = array<i32>} : memref<72x256xf32, #tpu.memory_space<vmem>>, vector<8x256xf32>,
    %c241_i32_42 = arith.constant 241 : i32
    %85 = tpu.dynamic_rotate %57 by %c241_i32_42 dim 1 : vector<8x256xf32>, i32 -> vector<8x256xf32>
    %86 = vector.extract_strided_slice %0 {offsets = [6, 0], sizes = [1, 256], strides = [1, 1]} : vector<9x256xf32> to vector<1x256xf32>
    %87 = vector.broadcast %86 : vector<1x256xf32> to vector<8x256xf32>
    %88 = arith.mulf %85, %87 : vector<8x256xf32>
    %c48 = arith.constant 48 : index
    %c0_43 = arith.constant 0 : index
    %89 = vector.load %arg9[%c48, %c0_43] : memref<72x256xf32, #tpu.memory_space<vmem>>, vector<8x256xf32>
    tpu.vector_store %arg9[%c48, %c0_43], %88 {strides = array<i32>} : memref<72x256xf32, #tpu.memory_space<vmem>>, vector<8x256xf32>,
    %c240_i32_44 = arith.constant 240 : i32
    %90 = tpu.dynamic_rotate %57 by %c240_i32_44 dim 1 : vector<8x256xf32>, i32 -> vector<8x256xf32>
    %91 = vector.extract_strided_slice %0 {offsets = [7, 0], sizes = [1, 256], strides = [1, 1]} : vector<9x256xf32> to vector<1x256xf32>
    %92 = vector.broadcast %91 : vector<1x256xf32> to vector<8x256xf32>
    %93 = arith.mulf %90, %92 : vector<8x256xf32>
    %c56 = arith.constant 56 : index
    %c0_45 = arith.constant 0 : index
    %94 = vector.load %arg9[%c56, %c0_45] : memref<72x256xf32, #tpu.memory_space<vmem>>, vector<8x256xf32>
    tpu.vector_store %arg9[%c56, %c0_45], %93 {strides = array<i32>} : memref<72x256xf32, #tpu.memory_space<vmem>>, vector<8x256xf32>,
    %c239_i32_46 = arith.constant 239 : i32
    %95 = tpu.dynamic_rotate %57 by %c239_i32_46 dim 1 : vector<8x256xf32>, i32 -> vector<8x256xf32>
    %96 = vector.extract_strided_slice %0 {offsets = [8, 0], sizes = [1, 256], strides = [1, 1]} : vector<9x256xf32> to vector<1x256xf32>
    %97 = vector.broadcast %96 : vector<1x256xf32> to vector<8x256xf32>
    %98 = arith.mulf %95, %97 : vector<8x256xf32>
    %c64 = arith.constant 64 : index
    %c0_47 = arith.constant 0 : index
    %99 = vector.load %arg9[%c64, %c0_47] : memref<72x256xf32, #tpu.memory_space<vmem>>, vector<8x256xf32>
    tpu.vector_store %arg9[%c64, %c0_47], %98 {strides = array<i32>} : memref<72x256xf32, #tpu.memory_space<vmem>>, vector<8x256xf32>,
    %c0_48 = arith.constant 0 : index
    %c0_49 = arith.constant 0 : index
    %100 = vector.load %arg9[%c0_48, %c0_49] : memref<72x256xf32, #tpu.memory_space<vmem>>, vector<72x256xf32>
    %cst_50 = arith.constant dense<0.000000e+00> : vector<8x256xf32>
    %101 = tpu.matmul %3, %100, %cst_50 {dimension_numbers = #tpu.dot_dimension_numbers<[1], [0], [0], [1], [0, 0, 1, 1], [], []>} : vector<8x72xf32>, vector<72x256xf32>, vector<8x256xf32> -> vector<8x256xf32>
    %102 = vector.broadcast %4 : vector<8x1xf32> to vector<8x256xf32>
    %103 = arith.addf %101, %102 : vector<8x256xf32>
    %104 = arith.addf %103, %58 : vector<8x256xf32>
    %105 = arith.negf %104 : vector<8x256xf32>
    %106 = math.exp %105 : vector<8x256xf32>
    %cst_51 = arith.constant 1.000000e+00 : f32
    %107 = vector.broadcast %cst_51 : f32 to vector<8x256xf32>
    %108 = arith.addf %107, %106 : vector<8x256xf32>
    %109 = arith.divf %107, %108 : vector<8x256xf32>
    %cst_52 = arith.constant 1.000000e+00 : f32
    %110 = vector.broadcast %cst_52 : f32 to vector<8x256xf32>
    %111 = arith.addf %110, %109 : vector<8x256xf32>
    %112 = arith.mulf %111, %54 : vector<8x256xf32>
    %c0_53 = arith.constant 0 : index
    %c0_54 = arith.constant 0 : index
    %c0_55 = arith.constant 0 : index
    %113 = vector.load %arg7[%c0_53, %c0_54, %c0_55] : memref<1x8x256xf32, #tpu.memory_space<vmem>>, vector<1x8x256xf32>
    %114 = vector.shape_cast %113 : vector<1x8x256xf32> to vector<8x256xf32>
    %115 = vector.shape_cast %112 : vector<8x256xf32> to vector<1x8x256xf32>
    tpu.vector_store %arg7[%c0_53, %c0_54, %c0_55], %115 {strides = array<i32>} : memref<1x8x256xf32, #tpu.memory_space<vmem>>, vector<1x8x256xf32>,
    return
  }
  func.func @transform_0(%arg0: i32) -> (i32, i32) {
    %c0_i32 = arith.constant 0 : i32
    %c0_i32_0 = arith.constant 0 : i32
    %c0_i32_1 = arith.constant 0 : i32
    return %c0_i32, %c0_i32_0 : i32, i32
  }
  func.func @transform_1(%arg0: i32) -> (i32, i32, i32) {
    %c0_i32 = arith.constant 0 : i32
    %c0_i32_0 = arith.constant 0 : i32
    %c0_i32_1 = arith.constant 0 : i32
    return %arg0, %c0_i32, %c0_i32_0 : i32, i32, i32
  }
  func.func @transform_2(%arg0: i32) -> (i32, i32) {
    %c0_i32 = arith.constant 0 : i32
    %c0_i32_0 = arith.constant 0 : i32
    %c0_i32_1 = arith.constant 0 : i32
    return %c0_i32, %c0_i32_0 : i32, i32
  }
  func.func @transform_3(%arg0: i32) -> (i32, i32) {
    %c0_i32 = arith.constant 0 : i32
    %c0_i32_0 = arith.constant 0 : i32
    %c0_i32_1 = arith.constant 0 : i32
    return %c0_i32, %c0_i32_0 : i32, i32
  }
  func.func @transform_4(%arg0: i32) -> (i32, i32) {
    %c0_i32 = arith.constant 0 : i32
    %c0_i32_0 = arith.constant 0 : i32
    %c0_i32_1 = arith.constant 0 : i32
    return %c0_i32, %c0_i32_0 : i32, i32
  }
  func.func @transform_5(%arg0: i32) -> (i32, i32) {
    %c0_i32 = arith.constant 0 : i32
    %c0_i32_0 = arith.constant 0 : i32
    %c0_i32_1 = arith.constant 0 : i32
    return %c0_i32, %c0_i32_0 : i32, i32
  }
  func.func @transform_6(%arg0: i32) -> (i32, i32, i32) {
    %c0_i32 = arith.constant 0 : i32
    %c0_i32_0 = arith.constant 0 : i32
    %c0_i32_1 = arith.constant 0 : i32
    return %arg0, %c0_i32, %c0_i32_0 : i32, i32, i32
  }
}

</mosaic_0001>

<llo_original>
// kernel: attention_stage4_forward.1
$region0: #{attention_stage4_forward.1}
  #allocation0 [shape = 'u32[]', space=smem, size = 0x4, offset = 0x4, fixed_abs, tag = 'smem constant byte address 0x4 - core index']
  #allocation1 [shape = 'u32[144,128]{1,0:T(1,128)}', space=vmem, size = 0x12000, scoped, tag = 'internal scratch']
  #allocation2 [shape = 'f32[36,256]{1,0:T(8,128)}', space=vmem, size = 0xa000, scoped, tag = 'scratch operand']
  #allocation3 [shape = 'f32[72,256]{1,0:T(8,128)}', space=vmem, size = 0x12000, scoped, tag = 'scratch operand']
  %s0 = inlined_call_operand.vmem [shape: f32[9,256], index: 0, kind: input, shape index: {}]
  %s1 = inlined_call_operand.vmem [shape: f32[2,4,256], index: 1, kind: input, shape index: {}]
  %s2 = inlined_call_operand.vmem [shape: f32[24,36], index: 2, kind: input, shape index: {}]
  %s3 = inlined_call_operand.vmem [shape: f32[24,1], index: 3, kind: input, shape index: {}]
  %s4 = inlined_call_operand.vmem [shape: f32[8,72], index: 4, kind: input, shape index: {}]
  %s5 = inlined_call_operand.vmem [shape: f32[8,1], index: 5, kind: input, shape index: {}]
  %s6 = inlined_call_operand.vmem [shape: f32[2,8,256], index: 6, kind: output, shape index: {}]
  %s7 = sld [smem:[#allocation0]]
  $region57: #{attention_stage4_forward.1} parent=0
    _
  %s9 = ssub.s32 1, %s7
  %s10 = scalar_select 0, %s9, %s7
  loop: start=0, step=1, limit=4
  $region2: #{attention_stage4_forward.1} parent=0 // loop_pre_header
    _
  $region3: #{attention_stage4_forward.1} parent=0 // loop_header
    %s12 = sphi 0, %s16
    %p13 = scmp.ge.s32.totalorder %s12, 4
    %s20 = sphi 0, %s20
    %s22 = sphi 0, %s20
    %s23 = sphi 0, %s22
    %s37 = sphi 0, %s23
    %s43 = sphi 0, %s45
    %s46 = sphi 0, %s43
    %s47 = sphi 0, %s46
    %s63 = sphi 0, %s47
    %s67 = sphi 0, %s67
    %s69 = sphi 0, %s67
    %s70 = sphi 0, %s69
    %s84 = sphi 0, %s70
    %s88 = sphi 0, %s88
    %s90 = sphi 0, %s88
    %s91 = sphi 0, %s90
    %s105 = sphi 0, %s91
    %s109 = sphi 0, %s109
    %s111 = sphi 0, %s109
    %s112 = sphi 0, %s111
    %s126 = sphi 0, %s112
    %s130 = sphi 0, %s130
    %s132 = sphi 0, %s130
    %s133 = sphi 0, %s132
    %s147 = sphi 0, %s133
    %s153 = sphi 0, %s155
    %s156 = sphi 0, %s153
    %s157 = sphi 0, %s156
    %s173 = sphi 0, %s157
  $region4: #{attention_stage4_forward.1} parent=0 // loop_header_branch
    %15 = sbr.rel (%p13) target = $region8
  $region5: #{attention_stage4_forward.1} parent=0 // loop_body
    %s17 = ssub.s32 %s12, 1
    %s18 = ssub.s32 %s12, 2
    %s19 = sadd.s32 %s12, 1
    %s21 = sadd.s32 %s20, 1
    %p24 = scmp.eq.s32.totalorder %s12, 1
    %p25 = scmp.ne.s32.totalorder %s20, %s22
    %p26 = scmp.eq.s32.totalorder %s12, 0
    %p27 = por %p25, %p26
    %p28 = scmp.ne.s32.totalorder %s20, %s22
    %p29 = scmp.eq.s32.totalorder %s17, 1
    %p30 = por %p28, %p29
    %p31 = scmp.ne.s32.totalorder %s22, %s23
    %p32 = scmp.eq.s32.totalorder %s17, 0
    %p33 = por %p31, %p32
    %p34 = scmp.ne.s32.totalorder %s22, %s23
    %p35 = scmp.eq.s32.totalorder %s18, 1
    %p36 = por %p34, %p35
    %p38 = scmp.ne.s32.totalorder %s23, %s37
    %p39 = scmp.eq.s32.totalorder %s18, 0
    %p40 = por %p38, %p39
    %s41 = ssub.s32 %s12, %s19
    %p42 = scmp.eq.s32.totalorder %s41, 0
    %s44 = sadd.s32 %s43, 1
    %s45 = scalar_select %p42, %s43, %s44
    %p48 = pneg %p42
    %p49 = scmp.eq.s32.totalorder %s12, 1
    %p50 = por %p48, %p49
    %p51 = scmp.ne.s32.totalorder %s43, %s46
    %p52 = scmp.eq.s32.totalorder %s12, 0
    %p53 = por %p51, %p52
    %p54 = scmp.ne.s32.totalorder %s43, %s46
    %p55 = scmp.eq.s32.totalorder %s17, 1
    %p56 = por %p54, %p55
    %p57 = scmp.ne.s32.totalorder %s46, %s47
    %p58 = scmp.eq.s32.totalorder %s17, 0
    %p59 = por %p57, %p58
    %p60 = scmp.ne.s32.totalorder %s46, %s47
    %p61 = scmp.eq.s32.totalorder %s18, 1
    %p62 = por %p60, %p61
    %p64 = scmp.ne.s32.totalorder %s47, %s63
    %p65 = scmp.eq.s32.totalorder %s18, 0
    %p66 = por %p64, %p65
    %s68 = sadd.s32 %s67, 1
    %p71 = scmp.eq.s32.totalorder %s12, 1
    %p72 = scmp.ne.s32.totalorder %s67, %s69
    %p73 = scmp.eq.s32.totalorder %s12, 0
    %p74 = por %p72, %p73
    %p75 = scmp.ne.s32.totalorder %s67, %s69
    %p76 = scmp.eq.s32.totalorder %s17, 1
    %p77 = por %p75, %p76
    %p78 = scmp.ne.s32.totalorder %s69, %s70
    %p79 = scmp.eq.s32.totalorder %s17, 0
    %p80 = por %p78, %p79
    %p81 = scmp.ne.s32.totalorder %s69, %s70
    %p82 = scmp.eq.s32.totalorder %s18, 1
    %p83 = por %p81, %p82
    %p85 = scmp.ne.s32.totalorder %s70, %s84
    %p86 = scmp.eq.s32.totalorder %s18, 0
    %p87 = por %p85, %p86
    %s89 = sadd.s32 %s88, 1
    %p92 = scmp.eq.s32.totalorder %s12, 1
    %p93 = scmp.ne.s32.totalorder %s88, %s90
    %p94 = scmp.eq.s32.totalorder %s12, 0
    %p95 = por %p93, %p94
    %p96 = scmp.ne.s32.totalorder %s88, %s90
    %p97 = scmp.eq.s32.totalorder %s17, 1
    %p98 = por %p96, %p97
    %p99 = scmp.ne.s32.totalorder %s90, %s91
    %p100 = scmp.eq.s32.totalorder %s17, 0
    %p101 = por %p99, %p100
    %p102 = scmp.ne.s32.totalorder %s90, %s91
    %p103 = scmp.eq.s32.totalorder %s18, 1
    %p104 = por %p102, %p103
    %p106 = scmp.ne.s32.totalorder %s91, %s105
    %p107 = scmp.eq.s32.totalorder %s18, 0
    %p108 = por %p106, %p107
    %s110 = sadd.s32 %s109, 1
    %p113 = scmp.eq.s32.totalorder %s12, 1
    %p114 = scmp.ne.s32.totalorder %s109, %s111
    %p115 = scmp.eq.s32.totalorder %s12, 0
    %p116 = por %p114, %p115
    %p117 = scmp.ne.s32.totalorder %s109, %s111
    %p118 = scmp.eq.s32.totalorder %s17, 1
    %p119 = por %p117, %p118
    %p120 = scmp.ne.s32.totalorder %s111, %s112
    %p121 = scmp.eq.s32.totalorder %s17, 0
    %p122 = por %p120, %p121
    %p123 = scmp.ne.s32.totalorder %s111, %s112
    %p124 = scmp.eq.s32.totalorder %s18, 1
    %p125 = por %p123, %p124
    %p127 = scmp.ne.s32.totalorder %s112, %s126
    %p128 = scmp.eq.s32.totalorder %s18, 0
    %p129 = por %p127, %p128
    %s131 = sadd.s32 %s130, 1
    %p134 = scmp.eq.s32.totalorder %s12, 1
    %p135 = scmp.ne.s32.totalorder %s130, %s132
    %p136 = scmp.eq.s32.totalorder %s12, 0
    %p137 = por %p135, %p136
    %p138 = scmp.ne.s32.totalorder %s130, %s132
    %p139 = scmp.eq.s32.totalorder %s17, 1
    %p140 = por %p138, %p139
    %p141 = scmp.ne.s32.totalorder %s132, %s133
    %p142 = scmp.eq.s32.totalorder %s17, 0
    %p143 = por %p141, %p142
    %p144 = scmp.ne.s32.totalorder %s132, %s133
    %p145 = scmp.eq.s32.totalorder %s18, 1
    %p146 = por %p144, %p145
    %p148 = scmp.ne.s32.totalorder %s133, %s147
    %p149 = scmp.eq.s32.totalorder %s18, 0
    %p150 = por %p148, %p149
    %s151 = ssub.s32 %s12, %s19
    %p152 = scmp.eq.s32.totalorder %s151, 0
    %s154 = sadd.s32 %s153, 1
    %s155 = scalar_select %p152, %s153, %s154
    %p158 = pneg %p152
    %p159 = scmp.eq.s32.totalorder %s12, 1
    %p160 = por %p158, %p159
    %p161 = scmp.ne.s32.totalorder %s153, %s156
    %p162 = scmp.eq.s32.totalorder %s12, 0
    %p163 = por %p161, %p162
    %p164 = scmp.ne.s32.totalorder %s153, %s156
    %p165 = scmp.eq.s32.totalorder %s17, 1
    %p166 = por %p164, %p165
    %p167 = scmp.ne.s32.totalorder %s156, %s157
    %p168 = scmp.eq.s32.totalorder %s17, 0
    %p169 = por %p167, %p168
    %p170 = scmp.ne.s32.totalorder %s156, %s157
    %p171 = scmp.eq.s32.totalorder %s18, 1
    %p172 = por %p170, %p171
    %p174 = scmp.ne.s32.totalorder %s157, %s173
    %p175 = scmp.eq.s32.totalorder %s18, 0
    %p176 = por %p174, %p175
    %p177 = scmp.le.s32.totalorder 1, %s12
    %p178 = scmp.lt.s32.totalorder %s12, 3
    %p179 = pnand %p177, %p178
    %p180 = pneg %p179
    // Predicated region
    $region9: #{attention_stage4_forward.1} parent=5 // pred_check
      _
    $region10: #{attention_stage4_forward.1} parent=5 // pred_check_branch
      %182 = sbr.rel (%p179) target = $region12
    $region11: #{attention_stage4_forward.1} parent=5 // pred_region
      %s183 = ssub.s32 %s12, 1
      // Predicated region
      $region13: #{attention_stage4_forward.1} parent=11 // pred_check
        %p184 = pneg %p33
      $region14: #{attention_stage4_forward.1} parent=11 // pred_check_branch
        %186 = sbr.rel (%p184) target = $region16
      $region15: #{attention_stage4_forward.1} parent=11 // pred_region
        _
      $region16: #{attention_stage4_forward.1} parent=11 // pred_fallthru
        _
      // Predicated region
      $region17: #{attention_stage4_forward.1} parent=11 // pred_check
        %p187 = pneg %p80
      $region18: #{attention_stage4_forward.1} parent=11 // pred_check_branch
        %189 = sbr.rel (%p187) target = $region20
      $region19: #{attention_stage4_forward.1} parent=11 // pred_region
        _
      $region20: #{attention_stage4_forward.1} parent=11 // pred_fallthru
        _
      // Predicated region
      $region21: #{attention_stage4_forward.1} parent=11 // pred_check
        %p190 = pneg %p101
      $region22: #{attention_stage4_forward.1} parent=11 // pred_check_branch
        %192 = sbr.rel (%p190) target = $region24
      $region23: #{attention_stage4_forward.1} parent=11 // pred_region
        _
      $region24: #{attention_stage4_forward.1} parent=11 // pred_fallthru
        _
      // Predicated region
      $region25: #{attention_stage4_forward.1} parent=11 // pred_check
        %p193 = pneg %p122
      $region26: #{attention_stage4_forward.1} parent=11 // pred_check_branch
        %195 = sbr.rel (%p193) target = $region28
      $region27: #{attention_stage4_forward.1} parent=11 // pred_region
        _
      $region28: #{attention_stage4_forward.1} parent=11 // pred_fallthru
        _
      // Predicated region
      $region29: #{attention_stage4_forward.1} parent=11 // pred_check
        %p196 = pneg %p143
      $region30: #{attention_stage4_forward.1} parent=11 // pred_check_branch
        %198 = sbr.rel (%p196) target = $region32
      $region31: #{attention_stage4_forward.1} parent=11 // pred_region
        _
      $region32: #{attention_stage4_forward.1} parent=11 // pred_fallthru
        _
    $region12: #{attention_stage4_forward.1} parent=5 // pred_fallthru
      _
    %p199 = scmp.lt.s32.totalorder %s12, 2
    // Predicated region
    $region33: #{attention_stage4_forward.1} parent=5 // pred_check
      %p200 = pneg %p199
    $region34: #{attention_stage4_forward.1} parent=5 // pred_check_branch
      %202 = sbr.rel (%p200) target = $region36
    $region35: #{attention_stage4_forward.1} parent=5 // pred_region
      // Predicated region
      $region37: #{attention_stage4_forward.1} parent=35 // pred_check
        %p203 = pneg %p53
      $region38: #{attention_stage4_forward.1} parent=35 // pred_check_branch
        %205 = sbr.rel (%p203) target = $region40
      $region39: #{attention_stage4_forward.1} parent=35 // pred_region
        %p206 = scmp.lt.s32.totalorder %s12, 1
        %s207 = scalar_select %p206, %s12, 1
        %s208 = smul.addr %s207, 2
        %s209 = smul.addr %s208, 4
        %s210 = scalar_lea.vmem %s1, %s209
      $region40: #{attention_stage4_forward.1} parent=35 // pred_fallthru
        _
    $region36: #{attention_stage4_forward.1} parent=5 // pred_fallthru
      _
    %p211 = scmp.le.s32.totalorder 1, %s12
    %p212 = scmp.lt.s32.totalorder %s12, 3
    %p213 = pnand %p211, %p212
    %p214 = pneg %p213
    // Predicated region
    $region41: #{attention_stage4_forward.1} parent=5 // pred_check
      _
    $region42: #{attention_stage4_forward.1} parent=5 // pred_check_branch
      %216 = sbr.rel (%p213) target = $region44
    $region43: #{attention_stage4_forward.1} parent=5 // pred_region
      %s217 = ssub.s32 %s12, 1
      %p218 = pneg %p33
      %p219 = pneg %p30
      %p220 = scmp.lt.s32.totalorder %s17, 1
      %s221 = scalar_select %p220, %s17, 1
      %s222 = smul.addr %s221, 2
      %s223 = smul.addr %s222, 4
      %s224 = scalar_lea.vmem %s1, %s223
      %p225 = pneg %p59
      %p226 = pneg %p56
      %p227 = pneg %p80
      %p228 = pneg %p77
      %p229 = pneg %p101
      %p230 = pneg %p98
      %p231 = pneg %p122
      %p232 = pneg %p119
      %p233 = pneg %p143
      %p234 = pneg %p140
      %p235 = pneg %p169
      %p236 = pneg %p166
      %p237 = scmp.lt.s32.totalorder %s17, 1
      %s238 = scalar_select %p237, %s17, 1
      %s239 = smul.addr %s238, 2
      %s240 = smul.addr %s239, 8
      %s241 = scalar_lea.vmem %s6, %s240
      %p242 = scmp.lt.s32.totalorder %s17, 1
      %s243 = scalar_select %p242, %s17, 1
      %s244 = smul.addr %s243, 2
      %s245 = smul.addr %s244, 4
      %s246 = scalar_lea.vmem %s1, %s245
      %p247 = scmp.lt.s32.totalorder %s17, 1
      %s248 = scalar_select %p247, %s17, 1
      %s249 = smul.addr %s248, 2
      %s250 = smul.addr %s249, 8
      %s251 = scalar_lea.vmem %s6, %s250
      %v252 = vld [vmem:[%s0] sm:$0xff]
      %v253 = vld [vmem:[%s0 + $0x8] sm:$0xff]
      %v254 = vld [vmem:[%s0 + $0x10] sm:$0x1]
      %v255 = vld [vmem:[%s0 + $0x18] sm:$0x1]
      %v256 = vld [vmem:[%s2] sm:$0xff]
      %v257 = vld [vmem:[%s2 + $0x8] sm:$0xff]
      %v258 = vld [vmem:[%s2 + $0x10] sm:$0xff]
      %v259 = vld [vmem:[%s3] sm:$0xff]
      %v260 = vld [vmem:[%s3 + $0x8] sm:$0xff]
      %v261 = vld [vmem:[%s3 + $0x10] sm:$0xff]
      %v262 = vld [vmem:[%s4] sm:$0xff]
      %v263 = vld [vmem:[%s5] sm:$0xff]
      %v264 = vld [vmem:[%s246] sm:$0xff]
      %v266 = vcombine.high %v264, %v264
      %268 = vrot.lane.b32.xlu0 %v264, 17
      %v269 = vpop.permute.xlu0 %268
      %270 = vrot.lane.b32.xlu0 %v266, 17
      %v271 = vpop.permute.xlu0 %270
      %v272 = vlaneseq
      %v273 = vand.u32 %v272, 127
      %vm274 = vcmp.lt.s32.totalorder %v273, 17
      %v275 = vsel %vm274, %v269, %v271
      %v276 = vsel %vm274, %v271, %v269
      %v277 = vlaneseq
      %v278 = vshrl.u32 %v277, 7
      %v279 = vsub.s32 0, %v278
      %v280 = vrot.slane %v252, %v279
      %v281 = vlaneseq
      %v282 = vshrl.u32 %v281, 7
      %v283 = vsub.s32 0, %v282
      %v284 = vrot.slane %v253, %v283
      %v285 = vmul.f32 %v276, %v280
      %v286 = vmul.f32 %v275, %v284
      %287 = vst [vmem:[#allocation2] sm:$0xf] %v285
      %288 = vst [vmem:[#allocation2 + $0x8] sm:$0xf] %v286
      %289 = vrot.lane.b32.xlu0 %v264, 16
      %v290 = vpop.permute.xlu0 %289
      %291 = vrot.lane.b32.xlu0 %v266, 16
      %v292 = vpop.permute.xlu0 %291
      %vm293 = vcmp.lt.s32.totalorder %v273, 16
      %v294 = vsel %vm293, %v290, %v292
      %v295 = vsel %vm293, %v292, %v290
      %v296 = vlaneseq
      %v297 = vshrl.u32 %v296, 7
      %v298 = vsub.s32 1, %v297
      %v299 = vrot.slane %v252, %v298
      %v300 = vlaneseq
      %v301 = vshrl.u32 %v300, 7
      %v302 = vsub.s32 1, %v301
      %v303 = vrot.slane %v253, %v302
      %v304 = vmul.f32 %v295, %v299
      %v305 = vmul.f32 %v294, %v303
      %v308 = vrot.slane %v304, 4
      %v309 = vrot.slane %v305, 4
      %312 = vst [vmem:[#allocation2] sm:$0xf0] %v308
      %313 = vst [vmem:[#allocation2 + $0x8] sm:$0xf0] %v309
      %314 = vrot.lane.b32.xlu0 %v264, 15
      %v315 = vpop.permute.xlu0 %314
      %316 = vrot.lane.b32.xlu0 %v266, 15
      %v317 = vpop.permute.xlu0 %316
      %vm318 = vcmp.lt.s32.totalorder %v273, 15
      %v319 = vsel %vm318, %v315, %v317
      %v320 = vsel %vm318, %v317, %v315
      %v321 = vlaneseq
      %v322 = vshrl.u32 %v321, 7
      %v323 = vsub.s32 2, %v322
      %v324 = vrot.slane %v252, %v323
      %v325 = vlaneseq
      %v326 = vshrl.u32 %v325, 7
      %v327 = vsub.s32 2, %v326
      %v328 = vrot.slane %v253, %v327
      %v329 = vmul.f32 %v320, %v324
      %v330 = vmul.f32 %v319, %v328
      %331 = vst [vmem:[#allocation2 + $0x10] sm:$0xf] %v329
      %332 = vst [vmem:[#allocation2 + $0x18] sm:$0xf] %v330
      %333 = vrot.lane.b32.xlu0 %v264, 1
      %v334 = vpop.permute.xlu0 %333
      %335 = vrot.lane.b32.xlu0 %v266, 1
      %v336 = vpop.permute.xlu0 %335
      %vm337 = vcmp.lt.s32.totalorder %v273, 1
      %v338 = vsel %vm337, %v334, %v336
      %v339 = vsel %vm337, %v336, %v334
      %v340 = vlaneseq
      %v341 = vshrl.u32 %v340, 7
      %v342 = vsub.s32 3, %v341
      %v343 = vrot.slane %v252, %v342
      %v344 = vlaneseq
      %v345 = vshrl.u32 %v344, 7
      %v346 = vsub.s32 3, %v345
      %v347 = vrot.slane %v253, %v346
      %v348 = vmul.f32 %v339, %v343
      %v349 = vmul.f32 %v338, %v347
      %v352 = vrot.slane %v348, 4
      %v353 = vrot.slane %v349, 4
      %356 = vst [vmem:[#allocation2 + $0x10] sm:$0xf0] %v352
      %357 = vst [vmem:[#allocation2 + $0x18] sm:$0xf0] %v353
      %358 = vst [vmem:[#allocation2 + $0x20] sm:$0xf] %v264
      %359 = vst [vmem:[#allocation2 + $0x28] sm:$0xf] %v266
      %360 = vrot.lane.b32.xlu0 %v264, 127
      %v361 = vpop.permute.xlu0 %360
      %362 = vrot.lane.b32.xlu0 %v266, 127
      %v363 = vpop.permute.xlu0 %362
      %vm364 = vcmp.lt.s32.totalorder %v273, 127
      %v365 = vsel %vm364, %v361, %v363
      %v366 = vsel %vm364, %v363, %v361
      %v367 = vlaneseq
      %v368 = vshrl.u32 %v367, 7
      %v369 = vsub.s32 5, %v368
      %v370 = vrot.slane %v252, %v369
      %v371 = vlaneseq
      %v372 = vshrl.u32 %v371, 7
      %v373 = vsub.s32 5, %v372
      %v374 = vrot.slane %v253, %v373
      %v375 = vmul.f32 %v365, %v370
      %v376 = vmul.f32 %v366, %v374
      %v379 = vrot.slane %v375, 4
      %v380 = vrot.slane %v376, 4
      %383 = vst [vmem:[#allocation2 + $0x20] sm:$0xf0] %v379
      %384 = vst [vmem:[#allocation2 + $0x28] sm:$0xf0] %v380
      %385 = vrot.lane.b32.xlu0 %v264, 113
      %v386 = vpop.permute.xlu0 %385
      %387 = vrot.lane.b32.xlu0 %v266, 113
      %v388 = vpop.permute.xlu0 %387
      %vm389 = vcmp.lt.s32.totalorder %v273, 113
      %v390 = vsel %vm389, %v386, %v388
      %v391 = vsel %vm389, %v388, %v386
      %v392 = vlaneseq
      %v393 = vshrl.u32 %v392, 7
      %v394 = vsub.s32 6, %v393
      %v395 = vrot.slane %v252, %v394
      %v396 = vlaneseq
      %v397 = vshrl.u32 %v396, 7
      %v398 = vsub.s32 6, %v397
      %v399 = vrot.slane %v253, %v398
      %v400 = vmul.f32 %v390, %v395
      %v401 = vmul.f32 %v391, %v399
      %402 = vst [vmem:[#allocation2 + $0x30] sm:$0xf] %v400
      %403 = vst [vmem:[#allocation2 + $0x38] sm:$0xf] %v401
      %404 = vrot.lane.b32.xlu0 %v264, 112
      %v405 = vpop.permute.xlu0 %404
      %406 = vrot.lane.b32.xlu0 %v266, 112
      %v407 = vpop.permute.xlu0 %406
      %vm408 = vcmp.lt.s32.totalorder %v273, 112
      %v409 = vsel %vm408, %v405, %v407
      %v410 = vsel %vm408, %v407, %v405
      %v411 = vlaneseq
      %v412 = vshrl.u32 %v411, 7
      %v413 = vsub.s32 7, %v412
      %v414 = vrot.slane %v252, %v413
      %v415 = vlaneseq
      %v416 = vshrl.u32 %v415, 7
      %v417 = vsub.s32 7, %v416
      %v418 = vrot.slane %v253, %v417
      %v419 = vmul.f32 %v409, %v414
      %v420 = vmul.f32 %v410, %v418
      %v423 = vrot.slane %v419, 4
      %v424 = vrot.slane %v420, 4
      %427 = vst [vmem:[#allocation2 + $0x30] sm:$0xf0] %v423
      %428 = vst [vmem:[#allocation2 + $0x38] sm:$0xf0] %v424
      %429 = vrot.lane.b32.xlu0 %v264, 111
      %v430 = vpop.permute.xlu0 %429
      %431 = vrot.lane.b32.xlu0 %v266, 111
      %v432 = vpop.permute.xlu0 %431
      %vm433 = vcmp.lt.s32.totalorder %v273, 111
      %v434 = vsel %vm433, %v430, %v432
      %v435 = vsel %vm433, %v432, %v430
      %v436 = vlaneseq
      %v437 = vshrl.u32 %v436, 7
      %v438 = vsub.s32 0, %v437
      %v439 = vrot.slane %v254, %v438
      %v440 = vlaneseq
      %v441 = vshrl.u32 %v440, 7
      %v442 = vsub.s32 0, %v441
      %v443 = vrot.slane %v255, %v442
      %v444 = vmul.f32 %v434, %v439
      %v445 = vmul.f32 %v435, %v443
      %446 = vst [vmem:[#allocation2 + $0x40] sm:$0xf] %v444
      %447 = vst [vmem:[#allocation2 + $0x48] sm:$0xf] %v445
      %v448 = vld [vmem:[#allocation2] sm:$0xff]
      %v449 = vld [vmem:[#allocation2 + $0x8] sm:$0xff]
      %v450 = vld [vmem:[#allocation2 + $0x10] sm:$0xff]
      %v451 = vld [vmem:[#allocation2 + $0x18] sm:$0xff]
      %v452 = vld [vmem:[#allocation2 + $0x20] sm:$0xff]
      %v453 = vld [vmem:[#allocation2 + $0x28] sm:$0xff]
      %v454 = vld [vmem:[#allocation2 + $0x30] sm:$0xff]
      %v455 = vld [vmem:[#allocation2 + $0x38] sm:$0xff]
      %v456 = vld [vmem:[#allocation2 + $0x40] sm:$0xf]
      %v457 = vld [vmem:[#allocation2 + $0x48] sm:$0xf]
      %459 = vset.pattern.permute.xlu0 0
      %460 = vperm.xlu0 %459, %v259
      %v461 = vpop.permute.xlu0 %460
      %464 = vset.pattern.permute.xlu0 0
      %465 = vperm.xlu0 %464, %v260
      %v466 = vpop.permute.xlu0 %465
      %469 = vset.pattern.permute.xlu0 0
      %470 = vperm.xlu0 %469, %v261
      %v471 = vpop.permute.xlu0 %470
      %vm473 = vcmask 293888
      %v475 = vsel %vm473, %v256, 0
      %v478 = vsel %vm473, %v257, 0
      %v481 = vsel %vm473, %v258, 0
      %vm483 = vcmask 1043456
      %v485 = vsel %vm483, %v456, 0
      %v488 = vsel %vm483, %v457, 0
      %490 = vmatprep.subr.mxu0 %v449
      %491 = vmatpush1.msra.mxu0 %v448
      %492 = vmatprep.subr.mxu0 %v451
      %493 = vmatpush1.msra.mxu0 %v450
      %494 = vmatprep.subr.mxu0 %v453
      %495 = vmatpush1.msra.mxu0 %v452
      %496 = vmatprep.subr.mxu0 %v455
      %497 = vmatpush1.msra.mxu0 %v454
      %498 = vmatprep.subr.mxu0 %v488
      %499 = vmatpush1.msra.mxu0 %v485
      %500 = vmatprep.subr.mxu0 0.0
      %501 = vmatpush1.msra.mxu0 0.0
      %502 = vmatprep.subr.mxu0 0.0
      %503 = vmatpush1.msra.mxu0 0.0
      %504 = vmatprep.subr.mxu0 0.0
      %505 = vmatpush1.msra.mxu0 0.0
      %506 = vmatprep.subr.mxu0 0.0
      %507 = vmatpush1.msra.mxu0 0.0
      %508 = vmatprep.subr.mxu0 0.0
      %509 = vmatpush1.msra.mxu0 0.0
      %510 = vmatprep.subr.mxu0 0.0
      %511 = vmatpush1.msra.mxu0 0.0
      %512 = vmatprep.subr.mxu0 0.0
      %513 = vmatpush1.msra.mxu0 0.0
      %514 = vmatprep.subr.mxu0 0.0
      %515 = vmatpush1.msra.mxu0 0.0
      %516 = vmatprep.subr.mxu0 0.0
      %517 = vmatpush1.msra.mxu0 0.0
      %518 = vmatprep.subr.mxu0 0.0
      %519 = vmatpush1.msra.mxu0 0.0
      %520 = vmatprep.subr.mxu0 0.0
      %521 = vmatpush1.msra.mxu0 0.0
      %522 = vmatprep.subr.mxu0 0.0
      %523 = vmatpush1.msra.mxu0 0.0
      %524 = vmatprep.subr.mxu0 0.0
      %525 = vmatpush1.msra.mxu0 0.0
      %526 = vmatprep.subr.mxu0 0.0
      %527 = vmatpush1.msra.mxu0 0.0
      %528 = vmatprep.subr.mxu0 0.0
      %529 = vmatpush1.msra.mxu0 0.0
      %530 = vmatprep.subr.mxu0 0.0
      %531 = vmatpush1.msra.mxu0 0.0
      %532 = vmatprep.subr.mxu0 0.0
      %533 = vmatpush1.msra.mxu0 0.0
      %534 = vmatprep.subr.mxu0 0.0
      %535 = vmatpush1.msra.mxu0 0.0
      %536 = vmatprep.subr.mxu0 0.0
      %537 = vmatpush1.msra.mxu0 0.0
      %538 = vmatprep.subr.mxu0 0.0
      %539 = vmatpush1.msra.mxu0 0.0
      %540 = vmatprep.subr.mxu0 0.0
      %541 = vmatpush1.msra.mxu0 0.0
      %542 = vmatprep.subr.mxu0 0.0
      %543 = vmatpush1.msra.mxu0 0.0
      %544 = vmatprep.subr.mxu0 0.0
      %545 = vmatpush1.msra.mxu0 0.0
      %546 = vmatprep.subr.mxu0 0.0
      %547 = vmatpush1.msra.mxu0 0.0
      %548 = vmatprep.subr.mxu0 0.0
      %549 = vmatpush1.msra.mxu0 0.0
      %550 = vmatprep.subr.mxu0 0.0
      %551 = vmatpush1.msra.mxu0 0.0
      %552 = vmatprep.subr.mxu0 0.0
      %553 = vmatpush1.msra.mxu0 0.0
      %554 = vmatprep.mubr.f32.mxu0 0.0
      %555 = vmatmul.mubr.f32.gmra.mrb[0].mxu0 %v475
      %v556 = vpop.f32.mrb[0].mxu0
      %v557 = vadd.f32 %v461, %v556
      %v558 = vpop.f32.mrb[0].mxu0
      %v559 = vadd.f32 %v461, %v558
      %560 = vmatprep.mubr.f32.mxu0 0.0
      %561 = vmatmul.mubr.f32.gmra.mrb[0].mxu0 %v478
      %v562 = vpop.f32.mrb[0].mxu0
      %v563 = vadd.f32 %v466, %v562
      %v564 = vpop.f32.mrb[0].mxu0
      %v565 = vadd.f32 %v466, %v564
      %566 = vmatprep.mubr.f32.mxu0 0.0
      %567 = vmatmul.mubr.f32.gmra.mrb[0].mxu0 %v481
      %v568 = vpop.f32.mrb[0].mxu0
      %v569 = vadd.f32 %v471, %v568
      %v570 = vpop.f32.mrb[0].mxu0
      %v571 = vadd.f32 %v471, %v570
      %572 = vdwg.mxu0
      %v573 = vmax.f32 %v557, 0.0
      %v574 = vmax.f32 %v559, 0.0
      %v575 = vmax.f32 %v563, 0.0
      %v576 = vmax.f32 %v565, 0.0
      %577 = vrot.lane.b32.xlu0 %v575, 17
      %v578 = vpop.permute.xlu0 %577
      %579 = vrot.lane.b32.xlu0 %v576, 17
      %v580 = vpop.permute.xlu0 %579
      %v581 = vsel %vm274, %v578, %v580
      %v582 = vsel %vm274, %v580, %v578
      %v583 = vmul.f32 %v582, %v280
      %v584 = vmul.f32 %v581, %v284
      %585 = vst [vmem:[#allocation3] sm:$0xff] %v583
      %586 = vst [vmem:[#allocation3 + $0x8] sm:$0xff] %v584
      %587 = vrot.lane.b32.xlu0 %v575, 16
      %v588 = vpop.permute.xlu0 %587
      %589 = vrot.lane.b32.xlu0 %v576, 16
      %v590 = vpop.permute.xlu0 %589
      %v591 = vsel %vm293, %v588, %v590
      %v592 = vsel %vm293, %v590, %v588
      %v593 = vmul.f32 %v592, %v299
      %v594 = vmul.f32 %v591, %v303
      %595 = vst [vmem:[#allocation3 + $0x10] sm:$0xff] %v593
      %596 = vst [vmem:[#allocation3 + $0x18] sm:$0xff] %v594
      %597 = vrot.lane.b32.xlu0 %v575, 15
      %v598 = vpop.permute.xlu0 %597
      %599 = vrot.lane.b32.xlu0 %v576, 15
      %v600 = vpop.permute.xlu0 %599
      %v601 = vsel %vm318, %v598, %v600
      %v602 = vsel %vm318, %v600, %v598
      %v603 = vmul.f32 %v602, %v324
      %v604 = vmul.f32 %v601, %v328
      %605 = vst [vmem:[#allocation3 + $0x20] sm:$0xff] %v603
      %606 = vst [vmem:[#allocation3 + $0x28] sm:$0xff] %v604
      %607 = vrot.lane.b32.xlu0 %v575, 1
      %v608 = vpop.permute.xlu0 %607
      %609 = vrot.lane.b32.xlu0 %v576, 1
      %v610 = vpop.permute.xlu0 %609
      %v611 = vsel %vm337, %v608, %v610
      %v612 = vsel %vm337, %v610, %v608
      %v613 = vmul.f32 %v612, %v343
      %v614 = vmul.f32 %v611, %v347
      %615 = vst [vmem:[#allocation3 + $0x30] sm:$0xff] %v613
      %616 = vst [vmem:[#allocation3 + $0x38] sm:$0xff] %v614
      %617 = vst [vmem:[#allocation3 + $0x40] sm:$0xff] %v575
      %618 = vst [vmem:[#allocation3 + $0x48] sm:$0xff] %v576
      %619 = vrot.lane.b32.xlu0 %v575, 127
      %v620 = vpop.permute.xlu0 %619
      %621 = vrot.lane.b32.xlu0 %v576, 127
      %v622 = vpop.permute.xlu0 %621
      %v623 = vsel %vm364, %v620, %v622
      %v624 = vsel %vm364, %v622, %v620
      %v625 = vmul.f32 %v623, %v370
      %v626 = vmul.f32 %v624, %v374
      %627 = vst [vmem:[#allocation3 + $0x50] sm:$0xff] %v625
      %628 = vst [vmem:[#allocation3 + $0x58] sm:$0xff] %v626
      %629 = vrot.lane.b32.xlu0 %v575, 113
      %v630 = vpop.permute.xlu0 %629
      %631 = vrot.lane.b32.xlu0 %v576, 113
      %v632 = vpop.permute.xlu0 %631
      %v633 = vsel %vm389, %v630, %v632
      %v634 = vsel %vm389, %v632, %v630
      %v635 = vmul.f32 %v633, %v395
      %v636 = vmul.f32 %v634, %v399
      %637 = vst [vmem:[#allocation3 + $0x60] sm:$0xff] %v635
      %638 = vst [vmem:[#allocation3 + $0x68] sm:$0xff] %v636
      %639 = vrot.lane.b32.xlu0 %v575, 112
      %v640 = vpop.permute.xlu0 %639
      %641 = vrot.lane.b32.xlu0 %v576, 112
      %v642 = vpop.permute.xlu0 %641
      %v643 = vsel %vm408, %v640, %v642
      %v644 = vsel %vm408, %v642, %v640
      %v645 = vmul.f32 %v643, %v414
      %v646 = vmul.f32 %v644, %v418
      %647 = vst [vmem:[#allocation3 + $0x70] sm:$0xff] %v645
      %648 = vst [vmem:[#allocation3 + $0x78] sm:$0xff] %v646
      %649 = vrot.lane.b32.xlu0 %v575, 111
      %v650 = vpop.permute.xlu0 %649
      %651 = vrot.lane.b32.xlu0 %v576, 111
      %v652 = vpop.permute.xlu0 %651
      %v653 = vsel %vm433, %v650, %v652
      %v654 = vsel %vm433, %v652, %v650
      %v655 = vmul.f32 %v653, %v439
      %v656 = vmul.f32 %v654, %v443
      %657 = vst [vmem:[#allocation3 + $0x80] sm:$0xff] %v655
      %658 = vst [vmem:[#allocation3 + $0x88] sm:$0xff] %v656
      %v659 = vld [vmem:[#allocation3] sm:$0xff]
      %v660 = vld [vmem:[#allocation3 + $0x8] sm:$0xff]
      %v661 = vld [vmem:[#allocation3 + $0x10] sm:$0xff]
      %v662 = vld [vmem:[#allocation3 + $0x18] sm:$0xff]
      %v663 = vld [vmem:[#allocation3 + $0x20] sm:$0xff]
      %v664 = vld [vmem:[#allocation3 + $0x28] sm:$0xff]
      %v665 = vld [vmem:[#allocation3 + $0x30] sm:$0xff]
      %v666 = vld [vmem:[#allocation3 + $0x38] sm:$0xff]
      %v667 = vld [vmem:[#allocation3 + $0x40] sm:$0xff]
      %v668 = vld [vmem:[#allocation3 + $0x48] sm:$0xff]
      %v669 = vld [vmem:[#allocation3 + $0x50] sm:$0xff]
      %v670 = vld [vmem:[#allocation3 + $0x58] sm:$0xff]
      %v671 = vld [vmem:[#allocation3 + $0x60] sm:$0xff]
      %v672 = vld [vmem:[#allocation3 + $0x68] sm:$0xff]
      %v673 = vld [vmem:[#allocation3 + $0x70] sm:$0xff]
      %v674 = vld [vmem:[#allocation3 + $0x78] sm:$0xff]
      %v675 = vld [vmem:[#allocation3 + $0x80] sm:$0xff]
      %v676 = vld [vmem:[#allocation3 + $0x88] sm:$0xff]
      %678 = vset.pattern.permute.xlu0 0
      %679 = vperm.xlu0 %678, %v263
      %v680 = vpop.permute.xlu0 %679
      %vm682 = vcmask 588800
      %v684 = vsel %vm682, %v262, 0
      %686 = vmatprep.subr.mxu0 %v660
      %687 = vmatpush1.msra.mxu0 %v659
      %688 = vmatprep.subr.mxu0 %v662
      %689 = vmatpush1.msra.mxu0 %v661
      %690 = vmatprep.subr.mxu0 %v664
      %691 = vmatpush1.msra.mxu0 %v663
      %692 = vmatprep.subr.mxu0 %v666
      %693 = vmatpush1.msra.mxu0 %v665
      %694 = vmatprep.subr.mxu0 %v668
      %695 = vmatpush1.msra.mxu0 %v667
      %696 = vmatprep.subr.mxu0 %v670
      %697 = vmatpush1.msra.mxu0 %v669
      %698 = vmatprep.subr.mxu0 %v672
      %699 = vmatpush1.msra.mxu0 %v671
      %700 = vmatprep.subr.mxu0 %v674
      %701 = vmatpush1.msra.mxu0 %v673
      %702 = vmatprep.subr.mxu0 %v676
      %703 = vmatpush1.msra.mxu0 %v675
      %704 = vmatprep.subr.mxu0 0.0
      %705 = vmatpush1.msra.mxu0 0.0
      %706 = vmatprep.subr.mxu0 0.0
      %707 = vmatpush1.msra.mxu0 0.0
      %708 = vmatprep.subr.mxu0 0.0
      %709 = vmatpush1.msra.mxu0 0.0
      %710 = vmatprep.subr.mxu0 0.0
      %711 = vmatpush1.msra.mxu0 0.0
      %712 = vmatprep.subr.mxu0 0.0
      %713 = vmatpush1.msra.mxu0 0.0
      %714 = vmatprep.subr.mxu0 0.0
      %715 = vmatpush1.msra.mxu0 0.0
      %716 = vmatprep.subr.mxu0 0.0
      %717 = vmatpush1.msra.mxu0 0.0
      %718 = vmatprep.subr.mxu0 0.0
      %719 = vmatpush1.msra.mxu0 0.0
      %720 = vmatprep.subr.mxu0 0.0
      %721 = vmatpush1.msra.mxu0 0.0
      %722 = vmatprep.subr.mxu0 0.0
      %723 = vmatpush1.msra.mxu0 0.0
      %724 = vmatprep.subr.mxu0 0.0
      %725 = vmatpush1.msra.mxu0 0.0
      %726 = vmatprep.subr.mxu0 0.0
      %727 = vmatpush1.msra.mxu0 0.0
      %728 = vmatprep.subr.mxu0 0.0
      %729 = vmatpush1.msra.mxu0 0.0
      %730 = vmatprep.subr.mxu0 0.0
      %731 = vmatpush1.msra.mxu0 0.0
      %732 = vmatprep.subr.mxu0 0.0
      %733 = vmatpush1.msra.mxu0 0.0
      %734 = vmatprep.subr.mxu0 0.0
      %735 = vmatpush1.msra.mxu0 0.0
      %736 = vmatprep.subr.mxu0 0.0
      %737 = vmatpush1.msra.mxu0 0.0
      %738 = vmatprep.subr.mxu0 0.0
      %739 = vmatpush1.msra.mxu0 0.0
      %740 = vmatprep.subr.mxu0 0.0
      %741 = vmatpush1.msra.mxu0 0.0
      %742 = vmatprep.subr.mxu0 0.0
      %743 = vmatpush1.msra.mxu0 0.0
      %744 = vmatprep.subr.mxu0 0.0
      %745 = vmatpush1.msra.mxu0 0.0
      %746 = vmatprep.subr.mxu0 0.0
      %747 = vmatpush1.msra.mxu0 0.0
      %748 = vmatprep.subr.mxu0 0.0
      %749 = vmatpush1.msra.mxu0 0.0
      %750 = vmatprep.mubr.f32.mxu0 0.0
      %751 = vmatmul.mubr.f32.gmra.mrb[0].mxu0 %v684
      %v752 = vpop.f32.mrb[0].mxu0
      %v753 = vadd.f32 %v680, %v752
      %v754 = vpop.f32.mrb[0].mxu0
      %v755 = vadd.f32 %v680, %v754
      %756 = vdwg.mxu0
      %v757 = vadd.f32 %v753, %v569
      %v758 = vadd.f32 %v755, %v571
      %v759 = vxor.u32 %v757, 2147483648
      %v760 = vxor.u32 %v758, 2147483648
      %v761 = vmul.f32 %v759, 1.442695
      %v762 = vpow.pop %v761
      %v763 = vmul.f32 %v760, 1.442695
      %v764 = vpow.pop %v763
      %v765 = vadd.f32 %v762, 1.0
      %v766 = vadd.f32 %v764, 1.0
      %v767 = vrcp.pop %v765
      %v768 = vmul.f32 1.0, %v767
      %v769 = vrcp.pop %v766
      %v770 = vmul.f32 1.0, %v769
      %v771 = vadd.f32 %v768, 1.0
      %v772 = vadd.f32 %v770, 1.0
      %v773 = vmul.f32 %v771, %v573
      %v774 = vmul.f32 %v772, %v574
      %775 = vst [vmem:[%s251] sm:$0xff] %v773
      %776 = vst [vmem:[%s251 + $0x8] sm:$0xff] %v774
      %p777 = scmp.lt.s32.totalorder %s17, 1
      %s778 = scalar_select %p777, %s17, 1
      %s779 = smul.addr %s778, 2
      %s780 = smul.addr %s779, 8
      %s781 = scalar_lea.vmem %s6, %s780
      // Predicated region
      $region45: #{attention_stage4_forward.1} parent=43 // pred_check
        %p782 = pneg %p166
      $region46: #{attention_stage4_forward.1} parent=43 // pred_check_branch
        %784 = sbr.rel (%p782) target = $region48
      $region47: #{attention_stage4_forward.1} parent=43 // pred_region
        _
      $region48: #{attention_stage4_forward.1} parent=43 // pred_fallthru
        _
    $region44: #{attention_stage4_forward.1} parent=5 // pred_fallthru
      _
    %p785 = scmp.le.s32.totalorder 2, %s12
    // Predicated region
    $region49: #{attention_stage4_forward.1} parent=5 // pred_check
      %p786 = pneg %p785
    $region50: #{attention_stage4_forward.1} parent=5 // pred_check_branch
      %788 = sbr.rel (%p786) target = $region52
    $region51: #{attention_stage4_forward.1} parent=5 // pred_region
      %s789 = ssub.s32 %s12, 2
      // Predicated region
      $region53: #{attention_stage4_forward.1} parent=51 // pred_check
        %p790 = pneg %p172
      $region54: #{attention_stage4_forward.1} parent=51 // pred_check_branch
        %792 = sbr.rel (%p790) target = $region56
      $region55: #{attention_stage4_forward.1} parent=51 // pred_region
        %p793 = scmp.lt.s32.totalorder %s18, 1
        %s794 = scalar_select %p793, %s18, 1
        %s795 = smul.addr %s794, 2
        %s796 = smul.addr %s795, 8
        %s797 = scalar_lea.vmem %s6, %s796
      $region56: #{attention_stage4_forward.1} parent=51 // pred_fallthru
        _
    $region52: #{attention_stage4_forward.1} parent=5 // pred_fallthru
      _
  $region6: #{attention_stage4_forward.1} parent=0 // loop_footer
    %s16 = sadd.s32 1, %s12
  $region7: #{attention_stage4_forward.1} parent=0 // loop_footer_branch
    %11 = sbr.rel target = $region3
  $region8: #{attention_stage4_forward.1} parent=0 // loop_exit
    _

</llo_original>
